<compile_context>
chip_gen: v7x
topology: tpu7x:2x2x1
jax: 0.10.0
libtpu: 0.0.40
codegen_flags: <defaults>
</compile_context>

<pallas_src>
import functools

import jax
import jax.numpy as jnp
from jax import lax
from jax.experimental import pallas as pl
from jax.experimental.pallas import tpu as pltpu


# Finite mask sentinel: avoids -inf - (-inf) -> NaN in the online-softmax update.
# NOTE: must be a plain Python float so it lowers as a literal (no captured array).
NEG_INF = -1e30


def _pick_tile(n, target):
    """Largest 8-aligned divisor of n that is <= target (or n itself if small/odd)."""
    if n <= target:
        return n
    for t in range(target, 7, -1):
        if n % t == 0 and t % 8 == 0:
            return t
    return n


# -----------------------------------------------------------------------------
# Kernel 1: generic bias-linear  y[b, t_tile] = x[b, t_tile] @ W + bias
# Used for the fused QKV projection (bias = 0) and for the output projection.
# -----------------------------------------------------------------------------
def _linear_kernel(x_ref, w_ref, b_ref, o_ref):
    x = x_ref[0]                                                    # (bt, K)
    y = jnp.dot(x, w_ref[...], preferred_element_type=jnp.float32)  # f32 accumulation
    o_ref[0] = (y + b_ref[...].astype(jnp.float32)).astype(o_ref.dtype)


def _linear(x, w, b, *, t_tile=256):
    B, T, K = x.shape
    N = w.shape[1]
    bt = _pick_tile(T, t_tile)
    return pl.pallas_call(
        _linear_kernel,
        out_shape=jax.ShapeDtypeStruct((B, T, N), x.dtype),
        grid_spec=pltpu.PrefetchScalarGridSpec(
            num_scalar_prefetch=0,
            grid=(B, T // bt),
            in_specs=[
                pl.BlockSpec((1, bt, K), lambda b, t: (b, t, 0)),   # x tile
                pl.BlockSpec((K, N), lambda b, t: (0, 0)),          # weight (resident)
                pl.BlockSpec((1, N), lambda b, t: (0, 0)),          # bias
            ],
            out_specs=pl.BlockSpec((1, bt, N), lambda b, t: (b, t, 0)),
        ),
        compiler_params=pltpu.CompilerParams(
            dimension_semantics=("parallel", "parallel"),
            vmem_limit_bytes=32 * 1024 * 1024),
    )(x, w, b)


# -----------------------------------------------------------------------------
# Kernel 2: flash attention (causal), grid = (B*H, q_tiles, kv_tiles)
# -----------------------------------------------------------------------------
def _flash_kernel(q_ref, k_ref, v_ref, o_ref, m_ref, l_ref, acc_ref,
                  *, tq, tk, scale):
    qi = pl.program_id(1)
    ki = pl.program_id(2)

    @pl.when(ki == 0)
    def _init():
        m_ref[...] = jnp.full(m_ref.shape, NEG_INF, dtype=m_ref.dtype)
        l_ref[...] = jnp.zeros(l_ref.shape, dtype=l_ref.dtype)
        acc_ref[...] = jnp.zeros(acc_ref.shape, dtype=acc_ref.dtype)

    # Causal block skipping: kv tile is visible iff its first key position is
    # <= the last query position of this q tile.  (kv tile 0 is always visible.)
    @pl.when(ki * tk <= qi * tq + (tq - 1))
    def _compute():
        q = q_ref[0]                                                # (tq, hd)
        k = k_ref[0]                                                # (tk, hd)
        v = v_ref[0]                                                # (tk, hd)

        # QK^T: contract the last dims directly — no physical transpose of K.
        s = lax.dot_general(q, k, (((1,), (1,)), ((), ())),
                            preferred_element_type=jnp.float32) * scale  # (tq, tk)

        # Element-level causal mask with global positions (finite sentinel).
        row = qi * tq + lax.broadcasted_iota(jnp.int32, (tq, tk), 0)
        col = ki * tk + lax.broadcasted_iota(jnp.int32, (tq, tk), 1)
        s = jnp.where(col > row, NEG_INF, s)

        # Online (running) softmax update.
        m_prev = m_ref[...]                                         # (tq, 1)
        m_new = jnp.maximum(m_prev, jnp.max(s, axis=-1, keepdims=True))
        alpha = jnp.exp(m_prev - m_new)                             # rescale factor
        p = jnp.exp(s - m_new)                                      # (tq, tk)

        l_ref[...] = alpha * l_ref[...] + jnp.sum(p, axis=-1, keepdims=True)
        acc_ref[...] = alpha * acc_ref[...] + jnp.dot(
            p.astype(v.dtype), v, preferred_element_type=jnp.float32)
        m_ref[...] = m_new

    @pl.when(ki == pl.num_programs(2) - 1)
    def _finalize():
        inv = pl.reciprocal(l_ref[...], approx=True)                # EUP slot, frees VALU
        o_ref[0] = (acc_ref[...] * inv).astype(o_ref.dtype)


def _flash_attention(q, k, v, *, q_tile=128, kv_tile=128):
    """q, k, v: (B*H, T, head_dim).  Returns (B*H, T, head_dim)."""
    BH, T, hd = q.shape
    # TODO(synk): per-generation tile tuning (v6e: 256+ tiles; v7x: keep <~28 MiB VMEM).
    tq = _pick_tile(T, q_tile)
    tk = _pick_tile(T, kv_tile)
    scale = 1.0 / (float(hd) ** 0.5)

    itemsize = jnp.dtype(q.dtype).itemsize
    cost = pl.CostEstimate(
        flops=int(2 * 2 * BH * T * T * hd * 0.5),       # QK^T + PV, ~half skipped (causal)
        transcendentals=int(BH * T * T * 0.5),          # exp
        bytes_accessed=int(4 * BH * T * hd * itemsize),  # q,k,v read + out write
    )

    kernel = functools.partial(_flash_kernel, tq=tq, tk=tk, scale=scale)
    return pl.pallas_call(
        kernel,
        out_shape=jax.ShapeDtypeStruct((BH, T, hd), q.dtype),
        grid_spec=pltpu.PrefetchScalarGridSpec(
            num_scalar_prefetch=0,
            grid=(BH, T // tq, T // tk),
            in_specs=[
                pl.BlockSpec((1, tq, hd), lambda bh, qi, ki: (bh, qi, 0)),  # Q
                pl.BlockSpec((1, tk, hd), lambda bh, qi, ki: (bh, ki, 0)),  # K
                pl.BlockSpec((1, tk, hd), lambda bh, qi, ki: (bh, ki, 0)),  # V
            ],
            out_specs=pl.BlockSpec((1, tq, hd), lambda bh, qi, ki: (bh, qi, 0)),
            scratch_shapes=[
                pltpu.VMEM((tq, 1), jnp.float32),    # running max
                pltpu.VMEM((tq, 1), jnp.float32),    # running sum
                pltpu.VMEM((tq, hd), jnp.float32),   # output accumulator
            ],
        ),
        compiler_params=pltpu.CompilerParams(
            dimension_semantics=("parallel", "parallel", "arbitrary"),
            vmem_limit_bytes=32 * 1024 * 1024),
        cost_estimate=cost,
    )(q, k, v)


# -----------------------------------------------------------------------------
# Full forward pass (matches the PyTorch module's forward semantics).
# -----------------------------------------------------------------------------
def multi_head_attention(x, wq, wk, wv, wo, bo, *, num_heads):
    """x: (B, T, d_in); wq/wk/wv: (d_in, d_out); wo: (d_out, d_out); bo: (1, d_out)."""
    B, T, d_in = x.shape
    d_out = wq.shape[1]
    assert d_out % num_heads == 0
    head_dim = d_out // num_heads

    # Fused QKV projection: one matmul instead of three (no bias: qkv_bias=False).
    w_qkv = jnp.concatenate([wq, wk, wv], axis=1)                   # (d_in, 3*d_out)
    zero_bias = jnp.zeros((1, 3 * d_out), dtype=x.dtype)
    qkv = _linear(x, w_qkv, zero_bias)                              # (B, T, 3*d_out)

    q, k, v = jnp.split(qkv, 3, axis=-1)                            # each (B, T, d_out)

    def to_heads(t):  # (B, T, d_out) -> (B*H, T, head_dim)  [layout plumbing only]
        return (t.reshape(B, T, num_heads, head_dim)
                 .transpose(0, 2, 1, 3)
                 .reshape(B * num_heads, T, head_dim))

    ctx = _flash_attention(to_heads(q), to_heads(k), to_heads(v))   # (B*H, T, hd)
    ctx = (ctx.reshape(B, num_heads, T, head_dim)
              .transpose(0, 2, 1, 3)
              .reshape(B, T, d_out))

    # Output projection (lane-dense d_out output tile).
    return _linear(ctx, wo, bo)


def reference_mha(x, wq, wk, wv, wo, bo, *, num_heads):
    """Pure-JAX reference mirroring the PyTorch forward (for sanity checking)."""
    B, T, d_in = x.shape
    d_out = wq.shape[1]
    head_dim = d_out // num_heads
    q = (x @ wq).reshape(B, T, num_heads, head_dim).transpose(0, 2, 1, 3)
    k = (x @ wk).reshape(B, T, num_heads, head_dim).transpose(0, 2, 1, 3)
    v = (x @ wv).reshape(B, T, num_heads, head_dim).transpose(0, 2, 1, 3)
    s = jnp.einsum("bhtd,bhsd->bhts", q, k)
    mask = jnp.triu(jnp.ones((T, T), dtype=bool), k=1)
    s = jnp.where(mask[None, None], -jnp.inf, s)
    w = jax.nn.softmax(s / (head_dim ** 0.5), axis=-1)
    ctx = jnp.einsum("bhts,bhsd->bhtd", w, v).transpose(0, 2, 1, 3).reshape(B, T, d_out)
    return ctx @ wo + bo[0]


if __name__ == "__main__":
    # Small, module-consistent shapes.
    B, T = 2, 8
    d_in, d_out = 32, 32
    num_heads = 4

    key = jax.random.PRNGKey(0)
    kx, kq, kk, kv, ko, kb = jax.random.split(key, 6)

    x = jax.random.normal(kx, (B, T, d_in), dtype=jnp.float32)
    wq = jax.random.normal(kq, (d_in, d_out), dtype=jnp.float32) * 0.1
    wk = jax.random.normal(kk, (d_in, d_out), dtype=jnp.float32) * 0.1
    wv = jax.random.normal(kv, (d_in, d_out), dtype=jnp.float32) * 0.1
    wo = jax.random.normal(ko, (d_out, d_out), dtype=jnp.float32) * 0.1
    bo = jax.random.normal(kb, (1, d_out), dtype=jnp.float32) * 0.1

    # f32 run, checked against the pure-JAX reference.
    out = multi_head_attention(x, wq, wk, wv, wo, bo, num_heads=num_heads)
    out = jax.block_until_ready(out)
    ref = reference_mha(x, wq, wk, wv, wo, bo, num_heads=num_heads)
    assert out.shape == (B, T, d_out)
    assert jnp.allclose(out, ref, atol=5e-3, rtol=5e-3), float(jnp.max(jnp.abs(out - ref)))

    # bf16 hot path (f32 accumulation inside the kernels) — smoke test.
    to_bf16 = lambda a: a.astype(jnp.bfloat16)
    out_bf16 = multi_head_attention(
        to_bf16(x), to_bf16(wq), to_bf16(wk), to_bf16(wv), to_bf16(wo), to_bf16(bo),
        num_heads=num_heads)
    out_bf16 = jax.block_until_ready(out_bf16)
    assert out_bf16.shape == (B, T, d_out)
    assert bool(jnp.all(jnp.isfinite(out_bf16.astype(jnp.float32))))
    assert jnp.allclose(out_bf16.astype(jnp.float32), ref, atol=1e-1, rtol=1e-1)

    print("KERNEL_OK")
</pallas_src>

<mosaic_0001>
module attributes {stable_mosaic.version = 11 : i64} {
  func.func @_linear_kernel(%arg0: i32, %arg1: i32, %arg2: memref<1x8x32xf32, #tpu.memory_space<vmem>>, %arg3: memref<32x96xf32, #tpu.memory_space<vmem>>, %arg4: memref<1x96xf32, #tpu.memory_space<vmem>>, %arg5: memref<1x8x96xf32, #tpu.memory_space<vmem>>) attributes {dimension_semantics = [#tpu.dimension_semantics<parallel>, #tpu.dimension_semantics<parallel>], iteration_bounds = array<i64: 2, 1>, scalar_prefetch = 0 : i64, scratch_operands = 0 : i64, tpu.core_type = #tpu.core_type<tc>, window_params = [{transform_indices = @transform_0, window_bounds = array<i64: 1, 8, 32>}, {pipeline_mode = #tpu.pipeline_mode<synchronous>, transform_indices = @transform_1, window_bounds = array<i64: 32, 96>}, {pipeline_mode = #tpu.pipeline_mode<synchronous>, transform_indices = @transform_2, window_bounds = array<i64: 1, 96>}, {transform_indices = @transform_3, window_bounds = array<i64: 1, 8, 96>}]} {
    %c0 = arith.constant 0 : index
    %c0_0 = arith.constant 0 : index
    %c0_1 = arith.constant 0 : index
    %0 = vector.load %arg2[%c0, %c0_0, %c0_1] : memref<1x8x32xf32, #tpu.memory_space<vmem>>, vector<1x8x32xf32>
    %1 = vector.shape_cast %0 : vector<1x8x32xf32> to vector<8x32xf32>
    %c0_2 = arith.constant 0 : index
    %c0_3 = arith.constant 0 : index
    %2 = vector.load %arg3[%c0_2, %c0_3] : memref<32x96xf32, #tpu.memory_space<vmem>>, vector<32x96xf32>
    %cst = arith.constant dense<0.000000e+00> : vector<8x96xf32>
    %3 = tpu.matmul %1, %2, %cst {dimension_numbers = #tpu.dot_dimension_numbers<[1], [0], [0], [1], [0, 0, 1, 1], [], []>} : vector<8x32xf32>, vector<32x96xf32>, vector<8x96xf32> -> vector<8x96xf32>
    %c0_4 = arith.constant 0 : index
    %c0_5 = arith.constant 0 : index
    %4 = vector.load %arg4[%c0_4, %c0_5] : memref<1x96xf32, #tpu.memory_space<vmem>>, vector<1x96xf32>
    %5 = vector.broadcast %4 : vector<1x96xf32> to vector<8x96xf32>
    %6 = arith.addf %3, %5 : vector<8x96xf32>
    %c0_6 = arith.constant 0 : index
    %c0_7 = arith.constant 0 : index
    %c0_8 = arith.constant 0 : index
    %7 = vector.load %arg5[%c0_6, %c0_7, %c0_8] : memref<1x8x96xf32, #tpu.memory_space<vmem>>, vector<1x8x96xf32>
    %8 = vector.shape_cast %7 : vector<1x8x96xf32> to vector<8x96xf32>
    %9 = vector.shape_cast %6 : vector<8x96xf32> to vector<1x8x96xf32>
    tpu.vector_store %arg5[%c0_6, %c0_7, %c0_8], %9 {strides = array<i32>} : memref<1x8x96xf32, #tpu.memory_space<vmem>>, vector<1x8x96xf32>,
    return
  }
  func.func @transform_0(%arg0: i32, %arg1: i32) -> (i32, i32, i32) {
    %c0_i32 = arith.constant 0 : i32
    %c0_i32_0 = arith.constant 0 : i32
    return %arg0, %arg1, %c0_i32 : i32, i32, i32
  }
  func.func @transform_1(%arg0: i32, %arg1: i32) -> (i32, i32) {
    %c0_i32 = arith.constant 0 : i32
    %c0_i32_0 = arith.constant 0 : i32
    %c0_i32_1 = arith.constant 0 : i32
    return %c0_i32, %c0_i32_0 : i32, i32
  }
  func.func @transform_2(%arg0: i32, %arg1: i32) -> (i32, i32) {
    %c0_i32 = arith.constant 0 : i32
    %c0_i32_0 = arith.constant 0 : i32
    %c0_i32_1 = arith.constant 0 : i32
    return %c0_i32, %c0_i32_0 : i32, i32
  }
  func.func @transform_3(%arg0: i32, %arg1: i32) -> (i32, i32, i32) {
    %c0_i32 = arith.constant 0 : i32
    %c0_i32_0 = arith.constant 0 : i32
    return %arg0, %arg1, %c0_i32 : i32, i32, i32
  }
}

</mosaic_0001>

<llo_original>
// kernel: tpu_custom_call.1
$region0: #{tpu_custom_call.1}
  #allocation0 [shape = 'u32[]', space=smem, size = 0x4, offset = 0x4, fixed_abs, tag = 'smem constant byte address 0x4 - core index']
  #allocation1 [shape = 'u32[144,128]{1,0:T(1,128)}', space=vmem, size = 0x12000, scoped, tag = 'internal scratch']
  %s0 = inlined_call_operand.hbm [shape: f32[2,8,32], index: 0, kind: input, shape index: {}]
  %s1 = inlined_call_operand.hbm [shape: f32[32,96], index: 1, kind: input, shape index: {}]
  %s2 = inlined_call_operand.vmem [shape: f32[1,96], index: 2, kind: input, shape index: {}]
  %s3 = inlined_call_operand.hbm [shape: f32[2,8,96], index: 3, kind: output, shape index: {}]
  %s4 = sld [smem:[#allocation0]]
  $region53: #{tpu_custom_call.1} parent=0
    _
  %s6 = ssub.s32 1, %s4
  %s7 = scalar_select 0, %s6, %s4
  $region1: #{tpu_custom_call.1} parent=0
    #allocation2 [shape = 'u8[8192]{0}', space=vmem, size = 0x2000, scoped, tag = 'input window, operand 0']
    #allocation3 [shape = 's32[2]{0}', space=sflag, size = 0x8, scoped, tag = 'scoped memory for tpu_custom_call.1']
    #allocation4 [shape = 's32[2]{0}', space=sflag, size = 0x8, scoped, tag = 'scoped memory for tpu_custom_call.1']
    #allocation5 [shape = 'u8[16384]{0}', space=vmem, size = 0x4000, scoped, tag = 'input window, operand 1, single buffered']
    #allocation6 [shape = 's32[1]{0}', space=sflag, size = 0x4, scoped, tag = 'scoped memory for tpu_custom_call.1']
    #allocation7 [shape = 'u8[8192]{0}', space=vmem, size = 0x2000, scoped, tag = 'output window, operand 0']
    %8 = vsyncpa [#allocation3], 0
    %s9 = scalar_lea.sflag [#allocation3], 1
    %10 = vsyncpa %s9, 0
    %11 = vsyncpa [#allocation6], 0
    %12 = vsyncpa [#allocation4], 0
    %s13 = scalar_lea.sflag [#allocation4], 1
    %14 = vsyncpa %s13, 0
    loop: start=0, step=1, limit=4
    $region2: #{tpu_custom_call.1} parent=1 // loop_pre_header
      _
    $region3: #{tpu_custom_call.1} parent=1 // loop_header
      %s16 = sphi 0, %s20
      %p17 = scmp.ge.s32.totalorder %s16, 4
      %s23 = sphi 0, %s35
      %s24 = sphi 0, %s31
      %s25 = sphi 0, %s23
      %s26 = sphi 0, %s24
      %s27 = sphi 0, %s25
      %s28 = sphi 0, %s26
      %s40 = sphi 0, %s42
      %s43 = sphi 0, %s40
      %s44 = sphi 0, %s43
      %s60 = sphi 0, %s44
      %s64 = sphi 0, %s64
      %s66 = sphi 0, %s64
      %s67 = sphi 0, %s66
      %s81 = sphi 0, %s67
      %s85 = sphi 0, %s85
      %s87 = sphi 0, %s85
      %s88 = sphi 0, %s87
      %s102 = sphi 0, %s88
      %s110 = sphi 0, %s112
      %s113 = sphi 0, %s110
      %s114 = sphi 0, %s113
      %s130 = sphi 0, %s114
    $region4: #{tpu_custom_call.1} parent=1 // loop_header_branch
      %19 = sbr.rel (%p17) target = $region8
    $region5: #{tpu_custom_call.1} parent=1 // loop_body
      %s21 = ssub.s32 %s16, 1
      %s22 = ssub.s32 %s16, 2
      %s29 = sadd.s32 1, %s24
      %p30 = scmp.ge.s32.totalorder %s29, 1
      %s31 = scalar_select %p30, 0, %s29
      %s32 = sadd.s32 1, %s23
      %s33 = scalar_select %p30, %s32, %s23
      %p34 = scmp.ge.s32.totalorder %s33, 2
      %s35 = scalar_select %p34, 0, %s33
      %s36 = ssub.s32 %s23, %s35
      %s37 = ssub.s32 %s24, %s31
      %s38 = sor.u32 %s36, %s37
      %p39 = scmp.eq.s32.totalorder %s38, 0
      %s41 = sadd.s32 %s40, 1
      %s42 = scalar_select %p39, %s40, %s41
      %p45 = pneg %p39
      %p46 = scmp.eq.s32.totalorder %s16, 1
      %p47 = por %p45, %p46
      %p48 = scmp.ne.s32.totalorder %s40, %s43
      %p49 = scmp.eq.s32.totalorder %s16, 0
      %p50 = por %p48, %p49
      %p51 = scmp.ne.s32.totalorder %s40, %s43
      %p52 = scmp.eq.s32.totalorder %s21, 1
      %p53 = por %p51, %p52
      %p54 = scmp.ne.s32.totalorder %s43, %s44
      %p55 = scmp.eq.s32.totalorder %s21, 0
      %p56 = por %p54, %p55
      %p57 = scmp.ne.s32.totalorder %s43, %s44
      %p58 = scmp.eq.s32.totalorder %s22, 1
      %p59 = por %p57, %p58
      %p61 = scmp.ne.s32.totalorder %s44, %s60
      %p62 = scmp.eq.s32.totalorder %s22, 0
      %p63 = por %p61, %p62
      %s65 = sadd.s32 %s64, 1
      %p68 = scmp.eq.s32.totalorder %s16, 1
      %p69 = scmp.ne.s32.totalorder %s64, %s66
      %p70 = scmp.eq.s32.totalorder %s16, 0
      %p71 = por %p69, %p70
      %p72 = scmp.ne.s32.totalorder %s64, %s66
      %p73 = scmp.eq.s32.totalorder %s21, 1
      %p74 = por %p72, %p73
      %p75 = scmp.ne.s32.totalorder %s66, %s67
      %p76 = scmp.eq.s32.totalorder %s21, 0
      %p77 = por %p75, %p76
      %p78 = scmp.ne.s32.totalorder %s66, %s67
      %p79 = scmp.eq.s32.totalorder %s22, 1
      %p80 = por %p78, %p79
      %p82 = scmp.ne.s32.totalorder %s67, %s81
      %p83 = scmp.eq.s32.totalorder %s22, 0
      %p84 = por %p82, %p83
      %s86 = sadd.s32 %s85, 1
      %p89 = scmp.eq.s32.totalorder %s16, 1
      %p90 = scmp.ne.s32.totalorder %s85, %s87
      %p91 = scmp.eq.s32.totalorder %s16, 0
      %p92 = por %p90, %p91
      %p93 = scmp.ne.s32.totalorder %s85, %s87
      %p94 = scmp.eq.s32.totalorder %s21, 1
      %p95 = por %p93, %p94
      %p96 = scmp.ne.s32.totalorder %s87, %s88
      %p97 = scmp.eq.s32.totalorder %s21, 0
      %p98 = por %p96, %p97
      %p99 = scmp.ne.s32.totalorder %s87, %s88
      %p100 = scmp.eq.s32.totalorder %s22, 1
      %p101 = por %p99, %p100
      %p103 = scmp.ne.s32.totalorder %s88, %s102
      %p104 = scmp.eq.s32.totalorder %s22, 0
      %p105 = por %p103, %p104
      %s106 = ssub.s32 %s23, %s35
      %s107 = ssub.s32 %s24, %s31
      %s108 = sor.u32 %s106, %s107
      %p109 = scmp.eq.s32.totalorder %s108, 0
      %s111 = sadd.s32 %s110, 1
      %s112 = scalar_select %p109, %s110, %s111
      %p115 = pneg %p109
      %p116 = scmp.eq.s32.totalorder %s16, 1
      %p117 = por %p115, %p116
      %p118 = scmp.ne.s32.totalorder %s110, %s113
      %p119 = scmp.eq.s32.totalorder %s16, 0
      %p120 = por %p118, %p119
      %p121 = scmp.ne.s32.totalorder %s110, %s113
      %p122 = scmp.eq.s32.totalorder %s21, 1
      %p123 = por %p121, %p122
      %p124 = scmp.ne.s32.totalorder %s113, %s114
      %p125 = scmp.eq.s32.totalorder %s21, 0
      %p126 = por %p124, %p125
      %p127 = scmp.ne.s32.totalorder %s113, %s114
      %p128 = scmp.eq.s32.totalorder %s22, 1
      %p129 = por %p127, %p128
      %p131 = scmp.ne.s32.totalorder %s114, %s130
      %p132 = scmp.eq.s32.totalorder %s22, 0
      %p133 = por %p131, %p132
      %p134 = scmp.le.s32.totalorder 1, %s16
      %p135 = scmp.lt.s32.totalorder %s16, 3
      %p136 = pnand %p134, %p135
      %p137 = pneg %p136
      // Predicated region
      $region9: #{tpu_custom_call.1} parent=5 // pred_check
        _
      $region10: #{tpu_custom_call.1} parent=5 // pred_check_branch
        %139 = sbr.rel (%p136) target = $region12
      $region11: #{tpu_custom_call.1} parent=5 // pred_region
        %s140 = ssub.s32 %s16, 1
        // Predicated region
        $region13: #{tpu_custom_call.1} parent=11 // pred_check
          %p141 = pneg %p77
        $region14: #{tpu_custom_call.1} parent=11 // pred_check_branch
          %143 = sbr.rel (%p141) target = $region16
        $region15: #{tpu_custom_call.1} parent=11 // pred_region
          %s145 = ssub.s32 512, 512
          %146 = vsyncadd [#allocation6], %s145
          %s147 = sshll.u32 [#allocation5], 4
          %s148 = int_to_ptr.vmem [resolvable:$true] %s147
          %153 = dma.hbm_to_vmem [thread:$0]  %s1, 512, %s148, [#allocation6], 128, 128, 8
        $region16: #{tpu_custom_call.1} parent=11 // pred_fallthru
          _
        // Predicated region
        $region17: #{tpu_custom_call.1} parent=11 // pred_check
          %p154 = pneg %p98
        $region18: #{tpu_custom_call.1} parent=11 // pred_check_branch
          %156 = sbr.rel (%p154) target = $region20
        $region19: #{tpu_custom_call.1} parent=11 // pred_region
          _
        $region20: #{tpu_custom_call.1} parent=11 // pred_fallthru
          _
      $region12: #{tpu_custom_call.1} parent=5 // pred_fallthru
        _
      %p157 = scmp.lt.s32.totalorder %s16, 2
      // Predicated region
      $region21: #{tpu_custom_call.1} parent=5 // pred_check
        %p158 = pneg %p157
      $region22: #{tpu_custom_call.1} parent=5 // pred_check_branch
        %160 = sbr.rel (%p158) target = $region24
      $region23: #{tpu_custom_call.1} parent=5 // pred_region
        // Predicated region
        $region25: #{tpu_custom_call.1} parent=23 // pred_check
          %p161 = pneg %p50
        $region26: #{tpu_custom_call.1} parent=23 // pred_check_branch
          %163 = sbr.rel (%p161) target = $region28
        $region27: #{tpu_custom_call.1} parent=23 // pred_region
          %s164 = sand.u32 %s40, 1
          %s165 = scalar_lea.sflag [#allocation3], %s164
          %s166 = sand.u32 %s40, 1
          %s167 = smul.addr %s166, 8
          %s168 = scalar_lea.vmem [#allocation2], %s167
          %s170 = ssub.s32 128, 128
          %171 = vsyncadd %s165, %s170
          %s172 = sadd.s32 %s24, %s23
          %s173 = smul.addr %s172, 128
          %s174 = scalar_lea.hbm %s0, %s173
          %s176 = sshll.u32 %s168, 4
          %s177 = int_to_ptr.vmem [resolvable:$true] %s176
          %179 = dma.hbm_to_vmem [thread:$0]  %s174, 128, %s177, %s165
        $region28: #{tpu_custom_call.1} parent=23 // pred_fallthru
          _
      $region24: #{tpu_custom_call.1} parent=5 // pred_fallthru
        _
      %p180 = scmp.le.s32.totalorder 1, %s16
      %p181 = scmp.lt.s32.totalorder %s16, 3
      %p182 = pnand %p180, %p181
      %p183 = pneg %p182
      // Predicated region
      $region29: #{tpu_custom_call.1} parent=5 // pred_check
        _
      $region30: #{tpu_custom_call.1} parent=5 // pred_check_branch
        %185 = sbr.rel (%p182) target = $region32
      $region31: #{tpu_custom_call.1} parent=5 // pred_region
        %s186 = ssub.s32 %s16, 1
        %s187 = sand.u32 %s43, 1
        %s188 = scalar_lea.sflag [#allocation3], %s187
        %s189 = sand.u32 %s43, 1
        %s190 = smul.addr %s189, 8
        %s191 = scalar_lea.vmem [#allocation2], %s190
        // Predicated region
        $region33: #{tpu_custom_call.1} parent=31 // pred_check
          %p192 = pneg %p56
        $region34: #{tpu_custom_call.1} parent=31 // pred_check_branch
          %194 = sbr.rel (%p192) target = $region36
        $region35: #{tpu_custom_call.1} parent=31 // pred_region
          %195 = dma.done %s188, 128
        $region36: #{tpu_custom_call.1} parent=31 // pred_fallthru
          _
        // Predicated region
        $region37: #{tpu_custom_call.1} parent=31 // pred_check
          %p196 = pneg %p77
        $region38: #{tpu_custom_call.1} parent=31 // pred_check_branch
          %198 = sbr.rel (%p196) target = $region40
        $region39: #{tpu_custom_call.1} parent=31 // pred_region
          %199 = dma.done [#allocation6], 512
        $region40: #{tpu_custom_call.1} parent=31 // pred_fallthru
          _
        %s200 = sand.u32 %s43, 1
        %s201 = scalar_lea.sflag [#allocation3], %s200
        %s202 = sand.u32 %s43, 1
        %s203 = smul.addr %s202, 8
        %s204 = scalar_lea.vmem [#allocation2], %s203
        %p205 = pneg %p56
        %p206 = pneg %p53
        %p207 = pneg %p77
        %p208 = pneg %p74
        %p209 = pneg %p98
        %p210 = pneg %p95
        %p211 = pneg %p126
        %p212 = pneg %p123
        %s213 = sand.u32 %s113, 1
        %s214 = scalar_lea.sflag [#allocation4], %s213
        %s215 = sand.u32 %s113, 1
        %s216 = smul.addr %s215, 8
        %s217 = scalar_lea.vmem [#allocation7], %s216
        %v218 = vld [vmem:[%s191] sm:$0xff]
        %v219 = vld [vmem:[#allocation5] sm:$0xff]
        %v220 = vld [vmem:[#allocation5 + $0x8] sm:$0xff]
        %v221 = vld [vmem:[#allocation5 + $0x10] sm:$0xff]
        %v222 = vld [vmem:[#allocation5 + $0x18] sm:$0xff]
        %v223 = vld [vmem:[%s2] sm:$0x1]
        %v225 = vlaneseq
        %v226 = vshrl.u32 %v225, 7
        %v227 = vsub.s32 0, %v226
        %v228 = vrot.slane %v223, %v227
        %vm230 = vcmask 261120
        %v232 = vsel %vm230, %v218, 0
        %234 = vmatprep.subr.mxu0 0.0
        %235 = vmatpush1.msra.mxu0 %v219
        %236 = vmatprep.subr.mxu0 0.0
        %237 = vmatpush1.msra.mxu0 %v220
        %238 = vmatprep.subr.mxu0 0.0
        %239 = vmatpush1.msra.mxu0 %v221
        %240 = vmatprep.subr.mxu0 0.0
        %241 = vmatpush1.msra.mxu0 %v222
        %242 = vmatprep.subr.mxu0 0.0
        %243 = vmatpush1.msra.mxu0 0.0
        %244 = vmatprep.subr.mxu0 0.0
        %245 = vmatpush1.msra.mxu0 0.0
        %246 = vmatprep.subr.mxu0 0.0
        %247 = vmatpush1.msra.mxu0 0.0
        %248 = vmatprep.subr.mxu0 0.0
        %249 = vmatpush1.msra.mxu0 0.0
        %250 = vmatprep.subr.mxu0 0.0
        %251 = vmatpush1.msra.mxu0 0.0
        %252 = vmatprep.subr.mxu0 0.0
        %253 = vmatpush1.msra.mxu0 0.0
        %254 = vmatprep.subr.mxu0 0.0
        %255 = vmatpush1.msra.mxu0 0.0
        %256 = vmatprep.subr.mxu0 0.0
        %257 = vmatpush1.msra.mxu0 0.0
        %258 = vmatprep.subr.mxu0 0.0
        %259 = vmatpush1.msra.mxu0 0.0
        %260 = vmatprep.subr.mxu0 0.0
        %261 = vmatpush1.msra.mxu0 0.0
        %262 = vmatprep.subr.mxu0 0.0
        %263 = vmatpush1.msra.mxu0 0.0
        %264 = vmatprep.subr.mxu0 0.0
        %265 = vmatpush1.msra.mxu0 0.0
        %266 = vmatprep.subr.mxu0 0.0
        %267 = vmatpush1.msra.mxu0 0.0
        %268 = vmatprep.subr.mxu0 0.0
        %269 = vmatpush1.msra.mxu0 0.0
        %270 = vmatprep.subr.mxu0 0.0
        %271 = vmatpush1.msra.mxu0 0.0
        %272 = vmatprep.subr.mxu0 0.0
        %273 = vmatpush1.msra.mxu0 0.0
        %274 = vmatprep.subr.mxu0 0.0
        %275 = vmatpush1.msra.mxu0 0.0
        %276 = vmatprep.subr.mxu0 0.0
        %277 = vmatpush1.msra.mxu0 0.0
        %278 = vmatprep.subr.mxu0 0.0
        %279 = vmatpush1.msra.mxu0 0.0
        %280 = vmatprep.subr.mxu0 0.0
        %281 = vmatpush1.msra.mxu0 0.0
        %282 = vmatprep.subr.mxu0 0.0
        %283 = vmatpush1.msra.mxu0 0.0
        %284 = vmatprep.subr.mxu0 0.0
        %285 = vmatpush1.msra.mxu0 0.0
        %286 = vmatprep.subr.mxu0 0.0
        %287 = vmatpush1.msra.mxu0 0.0
        %288 = vmatprep.subr.mxu0 0.0
        %289 = vmatpush1.msra.mxu0 0.0
        %290 = vmatprep.subr.mxu0 0.0
        %291 = vmatpush1.msra.mxu0 0.0
        %292 = vmatprep.subr.mxu0 0.0
        %293 = vmatpush1.msra.mxu0 0.0
        %294 = vmatprep.subr.mxu0 0.0
        %295 = vmatpush1.msra.mxu0 0.0
        %296 = vmatprep.subr.mxu0 0.0
        %297 = vmatpush1.msra.mxu0 0.0
        %298 = vmatprep.mubr.f32.mxu0 0.0
        %299 = vmatmul.mubr.f32.gmra.mrb[0].mxu0 %v232
        %v300 = vpop.f32.mrb[0].mxu0
        %v301 = vadd.f32 %v228, %v300
        %v302 = vpop.f32.mrb[0].mxu0
        %303 = vdwg.mxu0
        %vm304 = vcmask 785408
        %305 = vst.msk [vmem:[%s217] sm:$0xff] %vm304, %v301
        %s306 = sand.u32 %s113, 1
        %s307 = scalar_lea.sflag [#allocation4], %s306
        %s308 = sand.u32 %s113, 1
        %s309 = smul.addr %s308, 8
        %s310 = scalar_lea.vmem [#allocation7], %s309
        // Predicated region
        $region41: #{tpu_custom_call.1} parent=31 // pred_check
          %p311 = pneg %p123
        $region42: #{tpu_custom_call.1} parent=31 // pred_check_branch
          %313 = sbr.rel (%p311) target = $region44
        $region43: #{tpu_custom_call.1} parent=31 // pred_region
          %s315 = ssub.s32 128, 128
          %316 = vsyncadd %s307, %s315
          %s317 = sadd.s32 %s26, %s25
          %s318 = smul.addr %s317, 128
          %s319 = scalar_lea.hbm %s3, %s318
          %s321 = sshll.u32 %s310, 4
          %s322 = int_to_ptr.vmem [resolvable:$true] %s321
          %324 = dma.vmem_to_hbm [thread:$0]  %s322, 128, %s319, %s307
        $region44: #{tpu_custom_call.1} parent=31 // pred_fallthru
          _
      $region32: #{tpu_custom_call.1} parent=5 // pred_fallthru
        _
      %p325 = scmp.le.s32.totalorder 2, %s16
      // Predicated region
      $region45: #{tpu_custom_call.1} parent=5 // pred_check
        %p326 = pneg %p325
      $region46: #{tpu_custom_call.1} parent=5 // pred_check_branch
        %328 = sbr.rel (%p326) target = $region48
      $region47: #{tpu_custom_call.1} parent=5 // pred_region
        %s329 = ssub.s32 %s16, 2
        // Predicated region
        $region49: #{tpu_custom_call.1} parent=47 // pred_check
          %p330 = pneg %p129
        $region50: #{tpu_custom_call.1} parent=47 // pred_check_branch
          %332 = sbr.rel (%p330) target = $region52
        $region51: #{tpu_custom_call.1} parent=47 // pred_region
          %s333 = sand.u32 %s114, 1
          %s334 = scalar_lea.sflag [#allocation4], %s333
          %s335 = sand.u32 %s114, 1
          %s336 = smul.addr %s335, 8
          %s337 = scalar_lea.vmem [#allocation7], %s336
          %338 = dma.done %s334, 128
        $region52: #{tpu_custom_call.1} parent=47 // pred_fallthru
          _
      $region48: #{tpu_custom_call.1} parent=5 // pred_fallthru
        _
    $region6: #{tpu_custom_call.1} parent=1 // loop_footer
      %s20 = sadd.s32 1, %s16
    $region7: #{tpu_custom_call.1} parent=1 // loop_footer_branch
      %15 = sbr.rel target = $region3
    $region8: #{tpu_custom_call.1} parent=1 // loop_exit
      _
    %339 = vsyncpa [#allocation3], 1
    %s340 = scalar_lea.sflag [#allocation3], 1
    %341 = vsyncpa %s340, 1
    %342 = vsyncpa [#allocation6], 1
    %343 = vsyncpa [#allocation4], 1
    %s344 = scalar_lea.sflag [#allocation4], 1
    %345 = vsyncpa %s344, 1

</llo_original>
